<compile_context>
chip_gen: v7x
topology: tpu7x:2x2x1
jax: 0.10.0
libtpu: 0.0.40
codegen_flags: <defaults>
</compile_context>

<pallas_src>
import numpy as np
import jax
import jax.numpy as jnp
from jax import lax
from jax.experimental import pallas as pl
from jax.experimental.pallas import tpu as pltpu


_KRON_MAX_ELEMS = 4 * 1024 * 1024   # max H*W * (up*H * up*W) for the fused path


def _conv_matrix(f, length, up, pad0):
    """Matrix M (up*length, length) with (M @ v) == 1-D upfirdn(v, f, up, pad)."""
    f = np.asarray(f, dtype=np.float64)
    K = f.shape[0]
    ff = f[::-1]                       # upfirdn applies the flipped kernel
    out_len = length * up              # holds for this module's padding choice
    M = np.zeros((out_len, length), dtype=np.float64)
    for y in range(out_len):
        for k in range(K):
            m = y + k - pad0           # index into the virtual zero-upsampled signal
            if 0 <= m < length * up and m % up == 0:
                M[y, m // up] += ff[k]
    return M


def _to_coef(m):
    """Return (jax array, dtype): bf16 if exactly representable, else f32."""
    m32 = np.asarray(m, dtype=np.float32)
    mb = m32.astype(jnp.bfloat16)
    if np.array_equal(np.asarray(mb, dtype=np.float32), m32):
        return jnp.asarray(mb), jnp.bfloat16
    return jnp.asarray(m32), jnp.float32


def _vmem_capacity_bytes():
    try:
        return int(pltpu.get_tpu_info().vmem_capacity_bytes)
    except Exception:
        return 64 * 1024 * 1024        # conservative default (v7x-sized)


class Upsample:
    """JAX/Pallas port of the PyTorch Upsample module (upfirdn2d, up=factor)."""

    def __init__(self, kernel, factor=2):
        self.factor = int(factor)
        k = np.asarray(kernel, dtype=np.float64)
        if k.ndim == 1:
            kn = k / k.sum()
            # Separable: k2 == (kn*factor) outer (kn*factor); exact rank-1 term.
            self._terms = [(kn * self.factor, kn * self.factor)]
            k2 = np.outer(kn, kn) * self.factor ** 2
        else:
            k2 = k / k.sum() * self.factor ** 2
            u, s, vt = np.linalg.svd(k2)
            self._terms = [(u[:, r] * np.sqrt(s[r]), vt[r, :] * np.sqrt(s[r]))
                           for r in range(len(s)) if s[r] > 1e-12 * s[0]]
        self.k2 = k2.astype(np.float32)
        K = k2.shape[0]
        p = K - self.factor
        self.pad0 = (p + 1) // 2 + self.factor - 1
        self.pad1 = p // 2
        self._cache = {}

    # ----- generation-aware VMEM budgets ---------------------------------------
    def _budgets(self):
        cap = _vmem_capacity_bytes()
        if cap >= 100 * 1024 * 1024:
            # v5e / v6e: 128 MiB physical VMEM.
            return 28 << 20, 96 << 20, 4       # (ws budget, limit cap, min grid steps)
        # v7x: 64 MiB per TensorCore -> smaller budget, <=40 MiB limit, and >= 8
        # total grid steps so each of the 2 cores still double-buffers its DMA.
        return 20 << 20, 40 << 20, 8

    # ----- coefficient matrices -------------------------------------------------
    def _get_matrices(self, H, W):
        key = ("sep", H, W)
        if key not in self._cache:
            up = self.factor
            rt = np.stack([_conv_matrix(kr, H, up, self.pad0).T for kr, _ in self._terms])
            ct = np.stack([_conv_matrix(kc, W, up, self.pad0).T for _, kc in self._terms])
            rt_a, dt_r = _to_coef(rt)
            ct_a, dt_c = _to_coef(ct)
            if dt_r != dt_c:                    # keep both operands in one dtype
                rt_a, ct_a = jnp.asarray(rt.astype(np.float32)), jnp.asarray(ct.astype(np.float32))
                dt_r = jnp.float32
            self._cache[key] = (rt_a, ct_a, dt_r)   # (nr,H,UH), (nr,W,UW)
        return self._cache[key]

    def _get_kron(self, H, W):
        key = ("kron", H, W)
        if key not in self._cache:
            up = self.factor
            M = None
            for kr, kc in self._terms:
                R = _conv_matrix(kr, H, up, self.pad0)     # (UH, H)
                Cm = _conv_matrix(kc, W, up, self.pad0)    # (UW, W)
                term = np.kron(R.T, Cm.T)                  # (H*W, UH*UW)
                M = term if M is None else M + term
            self._cache[key] = _to_coef(M)
        return self._cache[key]

    # ----- forward ---------------------------------------------------------------
    def __call__(self, x):
        N, C, H, W = x.shape
        up = self.factor
        UH, UW = H * up, W * up
        NC = N * C
        in_b = x.dtype.itemsize
        out_b = in_b
        budget, limit_cap, target_steps = self._budgets()

        small = (UW < 128) or (W % 8 != 0) or (UH % 8 != 0)
        if small and (H * W) * (UH * UW) <= _KRON_MAX_ELEMS:
            return self._call_kron(x, NC, H, W, UH, UW, in_b, out_b,
                                   budget, limit_cap, target_steps)
        if (W % 8 == 0) and (UH % 8 == 0):
            return self._call_separable(x, NC, H, W, UH, UW, in_b, out_b,
                                        budget, limit_cap, target_steps)
        # TODO(synk): odd-sized spatial shapes with a too-large kron operand use
        # a plain-XLA fallback.
        return self._upfirdn2d_jax(x)

    # ----- path 1: small feature maps -> single fused lane-dense matmul ---------
    def _call_kron(self, x, NC, H, W, UH, UW, in_b, out_b,
                   budget, limit_cap, target_steps):
        N, C = x.shape[0], x.shape[1]
        HW, UHW = H * W, UH * UW
        m, cdtype = self._get_kron(H, W)
        cb = np.dtype(cdtype).itemsize
        prec = None if cdtype == jnp.bfloat16 else lax.Precision.HIGH

        # Working set: double-buffered in/out blocks + resident kron matrix
        # (single copy) + in-kernel cast and f32 result.
        fixed = HW * UHW * cb
        per_img = 2 * HW * in_b + 2 * UHW * out_b + HW * cb + UHW * 4
        tile = max(1, (budget - fixed) // per_img) if budget > fixed else 1
        tile = int(min(tile, NC))
        if NC > 8 * target_steps:
            tile = min(tile, NC // target_steps)
        # (8,128) block rule: second-to-last block dim multiple of 8 or == NC.
        tile = NC if NC <= 8 else max(8, (tile // 8) * 8)
        ws = fixed + tile * per_img
        vmem_limit = int(min(limit_cap, max(16 << 20, int(ws * 1.3) + (2 << 20))))

        xf = x.reshape(NC, HW)                 # contiguous metadata reshape

        def kernel_fn(x_ref, m_ref, o_ref):
            xv = x_ref[...].astype(cdtype)     # no-op when x is already bf16
            o_ref[...] = jnp.dot(xv, m_ref[...], precision=prec,
                                 preferred_element_type=jnp.float32).astype(o_ref.dtype)

        out = pl.pallas_call(
            kernel_fn,
            out_shape=jax.ShapeDtypeStruct((NC, UHW), x.dtype),
            grid=(pl.cdiv(NC, tile),),
            in_specs=[
                pl.BlockSpec((tile, HW), lambda i: (i, 0)),
                # Constant coefficients: whole array resident in VMEM (1 copy).
                pl.BlockSpec(memory_space=pltpu.MemorySpace.VMEM),
            ],
            out_specs=pl.BlockSpec((tile, UHW), lambda i: (i, 0)),
            compiler_params=pltpu.CompilerParams(
                dimension_semantics=("parallel",),
                vmem_limit_bytes=vmem_limit),
        )(xf, m)
        return out.reshape(N, C, UH, UW)

    # ----- path 2: separable two-matmul path (UW >= 128) -------------------------
    def _call_separable(self, x, NC, H, W, UH, UW, in_b, out_b,
                        budget, limit_cap, target_steps):
        N, C = x.shape[0], x.shape[1]
        rt, ct, cdtype = self._get_matrices(H, W)
        nr = int(rt.shape[0])                  # 1 for separable blur kernels
        cb = np.dtype(cdtype).itemsize
        prec = None if cdtype == jnp.bfloat16 else lax.Precision.HIGH

        # Working set: double-buffered in/out blocks, resident rt/ct (1 copy),
        # cast of x, f32 + cdtype copies of g around the mid transpose, f32 out.
        fixed = nr * (H * UH + W * UW) * cb
        per_img = (2 * H * W * in_b + 2 * UH * UW * out_b
                   + H * W * cb + UH * W * (4 + 2 * cb) + UH * UW * 4)
        tile = max(1, (budget - fixed) // per_img) if budget > fixed else 1
        tile = int(min(tile, NC))
        if NC >= target_steps:
            tile = min(tile, max(1, NC // target_steps))
        ws = fixed + tile * per_img
        vmem_limit = int(min(limit_cap, max(16 << 20, int(ws * 1.3) + (2 << 20))))

        xf = x.reshape(NC, H, W)
        tile_ = tile

        def kernel_fn(x_ref, rt_ref, ct_ref, o_ref):
            xv = x_ref[...].astype(cdtype)                         # (tile, H, W)
            xt = jnp.swapaxes(xv, 1, 2).reshape(tile_ * W, H)      # (tile*W, H)
            acc = None
            for r in range(nr):                                    # nr == 1 typically
                g = jnp.dot(xt, rt_ref[r], precision=prec,
                            preferred_element_type=jnp.float32)    # (tile*W, UH) f32
                # Keep the mid transpose in the compute dtype (halves XLU bytes).
                g = jnp.swapaxes(g.astype(cdtype).reshape(tile_, W, UH), 1, 2)
                o = jnp.dot(g.reshape(tile_ * UH, W), ct_ref[r], precision=prec,
                            preferred_element_type=jnp.float32)    # (tile*UH, UW) f32
                o = o.reshape(tile_, UH, UW)
                acc = o if acc is None else acc + o
            o_ref[...] = acc.astype(o_ref.dtype)                   # lane-dense store

        out = pl.pallas_call(
            kernel_fn,
            out_shape=jax.ShapeDtypeStruct((NC, UH, UW), x.dtype),
            grid=(pl.cdiv(NC, tile),),
            in_specs=[
                pl.BlockSpec((tile, H, W), lambda i: (i, 0, 0)),
                pl.BlockSpec(memory_space=pltpu.MemorySpace.VMEM),  # rt resident
                pl.BlockSpec(memory_space=pltpu.MemorySpace.VMEM),  # ct resident
            ],
            out_specs=pl.BlockSpec((tile, UH, UW), lambda i: (i, 0, 0)),
            compiler_params=pltpu.CompilerParams(
                dimension_semantics=("parallel",),
                vmem_limit_bytes=vmem_limit),
        )(xf, rt, ct)
        return out.reshape(N, C, UH, UW)

    # ----- plain-XLA fallback (only for shapes the Pallas paths gate out) --------
    def _upfirdn2d_jax(self, x):
        N, C, H, W = x.shape
        up = self.factor
        pad0, pad1 = self.pad0, self.pad1
        K = self.k2.shape[0]
        x_up = jnp.zeros((N, C, H * up, W * up), x.dtype).at[:, :, ::up, ::up].set(x)
        xp = jnp.pad(x_up, ((0, 0), (0, 0), (pad0, pad1), (pad0, pad1)))
        wf = jnp.asarray(self.k2[::-1, ::-1])
        outH = H * up + pad0 + pad1 - K + 1
        outW = W * up + pad0 + pad1 - K + 1
        out = jnp.zeros((N, C, outH, outW), jnp.float32)
        for ky in range(K):
            for kx in range(K):
                out = out + wf[ky, kx] * xp[:, :, ky:ky + outH, kx:kx + outW].astype(jnp.float32)
        return out.astype(x.dtype)


# ----- pure NumPy reference (upfirdn2d_native semantics) ------------------------
def upfirdn2d_ref_np(x, k2, up, pad0, pad1):
    N, C, H, W = x.shape
    K = k2.shape[0]
    upx = np.zeros((N, C, H * up, W * up), np.float32)
    upx[:, :, ::up, ::up] = x
    padded = np.pad(upx, ((0, 0), (0, 0), (pad0, pad1), (pad0, pad1)))
    wf = k2[::-1, ::-1]
    outH = H * up + pad0 + pad1 - K + 1
    outW = W * up + pad0 + pad1 - K + 1
    out = np.zeros((N, C, outH, outW), np.float32)
    for ky in range(K):
        for kx in range(K):
            out += wf[ky, kx] * padded[:, :, ky:ky + outH, kx:kx + outW]
    return out


if __name__ == "__main__":
    # Deterministic "parameters": the fixed StyleGAN2 blur kernel [1, 3, 3, 1].
    mod = Upsample(kernel=[1, 3, 3, 1], factor=2)

    # --- primary check: small feature map -> fused lane-dense (kron) path -------
    key = jax.random.PRNGKey(0)
    N, C, H, W = 2, 4, 16, 16
    x = jax.random.normal(key, (N, C, H, W), dtype=jnp.float32)
    # Quantize to a dyadic grid so the check is exact despite bf16 MXU operands.
    x = jnp.clip(jnp.round(x * 8.0) / 8.0, -4.0, 4.0)

    out = jax.block_until_ready(mod(x))
    assert out.shape == (N, C, H * 2, W * 2), out.shape
    ref = upfirdn2d_ref_np(np.asarray(x, np.float32), mod.k2, mod.factor,
                           mod.pad0, mod.pad1)
    np.testing.assert_allclose(np.asarray(out), ref, rtol=1e-4, atol=1e-4)

    # --- secondary check: larger feature map -> separable two-matmul path -------
    H2 = W2 = 64
    x2 = jax.random.normal(jax.random.PRNGKey(1), (1, 2, H2, W2), dtype=jnp.float32)
    x2 = jnp.clip(jnp.round(x2 * 8.0) / 8.0, -4.0, 4.0)
    out2 = jax.block_until_ready(mod(x2))
    assert out2.shape == (1, 2, H2 * 2, W2 * 2), out2.shape
    ref2 = upfirdn2d_ref_np(np.asarray(x2, np.float32), mod.k2, mod.factor,
                            mod.pad0, mod.pad1)
    np.testing.assert_allclose(np.asarray(out2), ref2, rtol=1e-4, atol=1e-4)

    print("KERNEL_OK")
</pallas_src>

<mosaic_0001>
module attributes {stable_mosaic.version = 11 : i64} {
  func.func @kernel_fn(%arg0: i32, %arg1: memref<8x256xf32, #tpu.memory_space<vmem>>, %arg2: memref<256x1024xbf16, #tpu.memory_space<vmem>>, %arg3: memref<8x1024xf32, #tpu.memory_space<vmem>>) attributes {dimension_semantics = [#tpu.dimension_semantics<parallel>], iteration_bounds = array<i64: 1>, scalar_prefetch = 0 : i64, scratch_operands = 0 : i64, tpu.core_type = #tpu.core_type<tc>, window_params = [{transform_indices = @transform_0, window_bounds = array<i64: 8, 256>}, {pipeline_mode = #tpu.pipeline_mode<synchronous>, transform_indices = @transform_1, window_bounds = array<i64: 256, 1024>}, {transform_indices = @transform_2, window_bounds = array<i64: 8, 1024>}]} {
    %c0 = arith.constant 0 : index
    %c0_0 = arith.constant 0 : index
    %0 = vector.load %arg1[%c0, %c0_0] : memref<8x256xf32, #tpu.memory_space<vmem>>, vector<8x256xf32>
    %1 = arith.truncf %0 : vector<8x256xf32> to vector<8x256xbf16>
    %c0_1 = arith.constant 0 : index
    %c0_2 = arith.constant 0 : index
    %2 = vector.load %arg2[%c0_1, %c0_2] : memref<256x1024xbf16, #tpu.memory_space<vmem>>, vector<256x1024xbf16>
    %cst = arith.constant dense<0.000000e+00> : vector<8x1024xf32>
    %3 = tpu.matmul %1, %2, %cst {dimension_numbers = #tpu.dot_dimension_numbers<[1], [0], [0], [1], [0, 0, 1, 1], [], []>} : vector<8x256xbf16>, vector<256x1024xbf16>, vector<8x1024xf32> -> vector<8x1024xf32>
    %c0_3 = arith.constant 0 : index
    %c0_4 = arith.constant 0 : index
    %4 = vector.load %arg3[%c0_3, %c0_4] : memref<8x1024xf32, #tpu.memory_space<vmem>>, vector<8x1024xf32>
    tpu.vector_store %arg3[%c0_3, %c0_4], %3 {strides = array<i32>} : memref<8x1024xf32, #tpu.memory_space<vmem>>, vector<8x1024xf32>,
    return
  }
  func.func @transform_0(%arg0: i32) -> (i32, i32) {
    %c0_i32 = arith.constant 0 : i32
    %c0_i32_0 = arith.constant 0 : i32
    return %arg0, %c0_i32 : i32, i32
  }
  func.func @transform_1(%arg0: i32) -> (i32, i32) {
    %c0_i32 = arith.constant 0 : i32
    %c0_i32_0 = arith.constant 0 : i32
    %c0_i32_1 = arith.constant 0 : i32
    return %c0_i32, %c0_i32_0 : i32, i32
  }
  func.func @transform_2(%arg0: i32) -> (i32, i32) {
    %c0_i32 = arith.constant 0 : i32
    %c0_i32_0 = arith.constant 0 : i32
    return %arg0, %c0_i32 : i32, i32
  }
}

</mosaic_0001>

<llo_original>
// kernel: tpu_custom_call.1
$region0: #{tpu_custom_call.1}
  #allocation0 [shape = 'u32[]', space=smem, size = 0x4, offset = 0x4, fixed_abs, tag = 'smem constant byte address 0x4 - core index']
  #allocation1 [shape = 'u32[144,128]{1,0:T(1,128)}', space=vmem, size = 0x12000, scoped, tag = 'internal scratch']
  %s0 = inlined_call_operand.hbm [shape: f32[8,256], index: 0, kind: input, shape index: {}]
  %s1 = inlined_call_operand.hbm [shape: bf16[256,1024], index: 1, kind: input, shape index: {}]
  %s2 = inlined_call_operand.hbm [shape: f32[8,1024], index: 2, kind: output, shape index: {}]
  %s3 = sld [smem:[#allocation0]]
  $region26: #{tpu_custom_call.1} parent=0
    _
  %s5 = ssub.s32 1, %s3
  %s6 = scalar_select 0, %s5, %s3
  $region1: #{tpu_custom_call.1} parent=0
    #allocation2 [shape = 'u8[8192]{0}', space=vmem, size = 0x2000, scoped, tag = 'input window, operand 0, single buffered']
    #allocation3 [shape = 's32[1]{0}', space=sflag, size = 0x4, scoped, tag = 'scoped memory for tpu_custom_call.1']
    #allocation4 [shape = 's32[1]{0}', space=sflag, size = 0x4, scoped, tag = 'scoped memory for tpu_custom_call.1']
    #allocation5 [shape = 'u8[524288]{0}', space=vmem, size = 0x80000, scoped, tag = 'input window, operand 1, single buffered']
    #allocation6 [shape = 's32[1]{0}', space=sflag, size = 0x4, scoped, tag = 'scoped memory for tpu_custom_call.1']
    #allocation7 [shape = 'u8[32768]{0}', space=vmem, size = 0x8000, scoped, tag = 'output window, operand 0, single buffered']
    %7 = vsyncpa [#allocation3], 0
    %8 = vsyncpa [#allocation6], 0
    %9 = vsyncpa [#allocation4], 0
    // Predicated region
    $region2: #{tpu_custom_call.1} parent=1 // pred_check
      _
    $region3: #{tpu_custom_call.1} parent=1 // pred_check_branch
      %11 = sbr.rel (0) target = $region5
    $region4: #{tpu_custom_call.1} parent=1 // pred_region
      %s13 = ssub.s32 256, 256
      %14 = vsyncadd [#allocation3], %s13
      %s16 = sshll.u32 [#allocation2], 4
      %s17 = int_to_ptr.vmem [resolvable:$true] %s16
      %19 = dma.hbm_to_vmem [thread:$0]  %s0, 256, %s17, [#allocation3]
    $region5: #{tpu_custom_call.1} parent=1 // pred_fallthru
      _
    // Predicated region
    $region6: #{tpu_custom_call.1} parent=1 // pred_check
      _
    $region7: #{tpu_custom_call.1} parent=1 // pred_check_branch
      %21 = sbr.rel (0) target = $region9
    $region8: #{tpu_custom_call.1} parent=1 // pred_region
      %s23 = ssub.s32 16384, 16384
      %24 = vsyncadd [#allocation6], %s23
      %s25 = sshll.u32 [#allocation5], 4
      %s26 = int_to_ptr.vmem [resolvable:$true] %s25
      %31 = dma.hbm_to_vmem [thread:$0]  %s1, 16384, %s26, [#allocation6], 512, 512, 32
    $region9: #{tpu_custom_call.1} parent=1 // pred_fallthru
      _
    // Predicated region
    $region10: #{tpu_custom_call.1} parent=1 // pred_check
      _
    $region11: #{tpu_custom_call.1} parent=1 // pred_check_branch
      %33 = sbr.rel (0) target = $region13
    $region12: #{tpu_custom_call.1} parent=1 // pred_region
      %34 = dma.done [#allocation3], 256
    $region13: #{tpu_custom_call.1} parent=1 // pred_fallthru
      _
    // Predicated region
    $region14: #{tpu_custom_call.1} parent=1 // pred_check
      _
    $region15: #{tpu_custom_call.1} parent=1 // pred_check_branch
      %36 = sbr.rel (0) target = $region17
    $region16: #{tpu_custom_call.1} parent=1 // pred_region
      %37 = dma.done [#allocation6], 16384
    $region17: #{tpu_custom_call.1} parent=1 // pred_fallthru
      _
    %v38 = vld [vmem:[#allocation2] sm:$0xff]
    %v39 = vld [vmem:[#allocation2 + $0x8] sm:$0xff]
    %v40 = vpack.c.bf16 %v38, %v38
    %v41 = vpack.c.bf16 %v39, %v39
    %v42 = vld [vmem:[#allocation5] sm:$0xff]
    %v43 = vld [vmem:[#allocation5 + $0x8] sm:$0xff]
    %v44 = vld [vmem:[#allocation5 + $0x10] sm:$0xff]
    %v45 = vld [vmem:[#allocation5 + $0x18] sm:$0xff]
    %v46 = vld [vmem:[#allocation5 + $0x20] sm:$0xff]
    %v47 = vld [vmem:[#allocation5 + $0x28] sm:$0xff]
    %v48 = vld [vmem:[#allocation5 + $0x30] sm:$0xff]
    %v49 = vld [vmem:[#allocation5 + $0x38] sm:$0xff]
    %v50 = vld [vmem:[#allocation5 + $0x40] sm:$0xff]
    %v51 = vld [vmem:[#allocation5 + $0x48] sm:$0xff]
    %v52 = vld [vmem:[#allocation5 + $0x50] sm:$0xff]
    %v53 = vld [vmem:[#allocation5 + $0x58] sm:$0xff]
    %v54 = vld [vmem:[#allocation5 + $0x60] sm:$0xff]
    %v55 = vld [vmem:[#allocation5 + $0x68] sm:$0xff]
    %v56 = vld [vmem:[#allocation5 + $0x70] sm:$0xff]
    %v57 = vld [vmem:[#allocation5 + $0x78] sm:$0xff]
    %v58 = vld [vmem:[#allocation5 + $0x80] sm:$0xff]
    %v59 = vld [vmem:[#allocation5 + $0x88] sm:$0xff]
    %v60 = vld [vmem:[#allocation5 + $0x90] sm:$0xff]
    %v61 = vld [vmem:[#allocation5 + $0x98] sm:$0xff]
    %v62 = vld [vmem:[#allocation5 + $0xa0] sm:$0xff]
    %v63 = vld [vmem:[#allocation5 + $0xa8] sm:$0xff]
    %v64 = vld [vmem:[#allocation5 + $0xb0] sm:$0xff]
    %v65 = vld [vmem:[#allocation5 + $0xb8] sm:$0xff]
    %v66 = vld [vmem:[#allocation5 + $0xc0] sm:$0xff]
    %v67 = vld [vmem:[#allocation5 + $0xc8] sm:$0xff]
    %v68 = vld [vmem:[#allocation5 + $0xd0] sm:$0xff]
    %v69 = vld [vmem:[#allocation5 + $0xd8] sm:$0xff]
    %v70 = vld [vmem:[#allocation5 + $0xe0] sm:$0xff]
    %v71 = vld [vmem:[#allocation5 + $0xe8] sm:$0xff]
    %v72 = vld [vmem:[#allocation5 + $0xf0] sm:$0xff]
    %v73 = vld [vmem:[#allocation5 + $0xf8] sm:$0xff]
    %v74 = vld [vmem:[#allocation5 + $0x100] sm:$0xff]
    %v75 = vld [vmem:[#allocation5 + $0x108] sm:$0xff]
    %v76 = vld [vmem:[#allocation5 + $0x110] sm:$0xff]
    %v77 = vld [vmem:[#allocation5 + $0x118] sm:$0xff]
    %v78 = vld [vmem:[#allocation5 + $0x120] sm:$0xff]
    %v79 = vld [vmem:[#allocation5 + $0x128] sm:$0xff]
    %v80 = vld [vmem:[#allocation5 + $0x130] sm:$0xff]
    %v81 = vld [vmem:[#allocation5 + $0x138] sm:$0xff]
    %v82 = vld [vmem:[#allocation5 + $0x140] sm:$0xff]
    %v83 = vld [vmem:[#allocation5 + $0x148] sm:$0xff]
    %v84 = vld [vmem:[#allocation5 + $0x150] sm:$0xff]
    %v85 = vld [vmem:[#allocation5 + $0x158] sm:$0xff]
    %v86 = vld [vmem:[#allocation5 + $0x160] sm:$0xff]
    %v87 = vld [vmem:[#allocation5 + $0x168] sm:$0xff]
    %v88 = vld [vmem:[#allocation5 + $0x170] sm:$0xff]
    %v89 = vld [vmem:[#allocation5 + $0x178] sm:$0xff]
    %v90 = vld [vmem:[#allocation5 + $0x180] sm:$0xff]
    %v91 = vld [vmem:[#allocation5 + $0x188] sm:$0xff]
    %v92 = vld [vmem:[#allocation5 + $0x190] sm:$0xff]
    %v93 = vld [vmem:[#allocation5 + $0x198] sm:$0xff]
    %v94 = vld [vmem:[#allocation5 + $0x1a0] sm:$0xff]
    %v95 = vld [vmem:[#allocation5 + $0x1a8] sm:$0xff]
    %v96 = vld [vmem:[#allocation5 + $0x1b0] sm:$0xff]
    %v97 = vld [vmem:[#allocation5 + $0x1b8] sm:$0xff]
    %v98 = vld [vmem:[#allocation5 + $0x1c0] sm:$0xff]
    %v99 = vld [vmem:[#allocation5 + $0x1c8] sm:$0xff]
    %v100 = vld [vmem:[#allocation5 + $0x1d0] sm:$0xff]
    %v101 = vld [vmem:[#allocation5 + $0x1d8] sm:$0xff]
    %v102 = vld [vmem:[#allocation5 + $0x1e0] sm:$0xff]
    %v103 = vld [vmem:[#allocation5 + $0x1e8] sm:$0xff]
    %v104 = vld [vmem:[#allocation5 + $0x1f0] sm:$0xff]
    %v105 = vld [vmem:[#allocation5 + $0x1f8] sm:$0xff]
    %v106 = vld [vmem:[#allocation5 + $0x200] sm:$0xff]
    %v107 = vld [vmem:[#allocation5 + $0x208] sm:$0xff]
    %v108 = vld [vmem:[#allocation5 + $0x210] sm:$0xff]
    %v109 = vld [vmem:[#allocation5 + $0x218] sm:$0xff]
    %v110 = vld [vmem:[#allocation5 + $0x220] sm:$0xff]
    %v111 = vld [vmem:[#allocation5 + $0x228] sm:$0xff]
    %v112 = vld [vmem:[#allocation5 + $0x230] sm:$0xff]
    %v113 = vld [vmem:[#allocation5 + $0x238] sm:$0xff]
    %v114 = vld [vmem:[#allocation5 + $0x240] sm:$0xff]
    %v115 = vld [vmem:[#allocation5 + $0x248] sm:$0xff]
    %v116 = vld [vmem:[#allocation5 + $0x250] sm:$0xff]
    %v117 = vld [vmem:[#allocation5 + $0x258] sm:$0xff]
    %v118 = vld [vmem:[#allocation5 + $0x260] sm:$0xff]
    %v119 = vld [vmem:[#allocation5 + $0x268] sm:$0xff]
    %v120 = vld [vmem:[#allocation5 + $0x270] sm:$0xff]
    %v121 = vld [vmem:[#allocation5 + $0x278] sm:$0xff]
    %v122 = vld [vmem:[#allocation5 + $0x280] sm:$0xff]
    %v123 = vld [vmem:[#allocation5 + $0x288] sm:$0xff]
    %v124 = vld [vmem:[#allocation5 + $0x290] sm:$0xff]
    %v125 = vld [vmem:[#allocation5 + $0x298] sm:$0xff]
    %v126 = vld [vmem:[#allocation5 + $0x2a0] sm:$0xff]
    %v127 = vld [vmem:[#allocation5 + $0x2a8] sm:$0xff]
    %v128 = vld [vmem:[#allocation5 + $0x2b0] sm:$0xff]
    %v129 = vld [vmem:[#allocation5 + $0x2b8] sm:$0xff]
    %v130 = vld [vmem:[#allocation5 + $0x2c0] sm:$0xff]
    %v131 = vld [vmem:[#allocation5 + $0x2c8] sm:$0xff]
    %v132 = vld [vmem:[#allocation5 + $0x2d0] sm:$0xff]
    %v133 = vld [vmem:[#allocation5 + $0x2d8] sm:$0xff]
    %v134 = vld [vmem:[#allocation5 + $0x2e0] sm:$0xff]
    %v135 = vld [vmem:[#allocation5 + $0x2e8] sm:$0xff]
    %v136 = vld [vmem:[#allocation5 + $0x2f0] sm:$0xff]
    %v137 = vld [vmem:[#allocation5 + $0x2f8] sm:$0xff]
    %v138 = vld [vmem:[#allocation5 + $0x300] sm:$0xff]
    %v139 = vld [vmem:[#allocation5 + $0x308] sm:$0xff]
    %v140 = vld [vmem:[#allocation5 + $0x310] sm:$0xff]
    %v141 = vld [vmem:[#allocation5 + $0x318] sm:$0xff]
    %v142 = vld [vmem:[#allocation5 + $0x320] sm:$0xff]
    %v143 = vld [vmem:[#allocation5 + $0x328] sm:$0xff]
    %v144 = vld [vmem:[#allocation5 + $0x330] sm:$0xff]
    %v145 = vld [vmem:[#allocation5 + $0x338] sm:$0xff]
    %v146 = vld [vmem:[#allocation5 + $0x340] sm:$0xff]
    %v147 = vld [vmem:[#allocation5 + $0x348] sm:$0xff]
    %v148 = vld [vmem:[#allocation5 + $0x350] sm:$0xff]
    %v149 = vld [vmem:[#allocation5 + $0x358] sm:$0xff]
    %v150 = vld [vmem:[#allocation5 + $0x360] sm:$0xff]
    %v151 = vld [vmem:[#allocation5 + $0x368] sm:$0xff]
    %v152 = vld [vmem:[#allocation5 + $0x370] sm:$0xff]
    %v153 = vld [vmem:[#allocation5 + $0x378] sm:$0xff]
    %v154 = vld [vmem:[#allocation5 + $0x380] sm:$0xff]
    %v155 = vld [vmem:[#allocation5 + $0x388] sm:$0xff]
    %v156 = vld [vmem:[#allocation5 + $0x390] sm:$0xff]
    %v157 = vld [vmem:[#allocation5 + $0x398] sm:$0xff]
    %v158 = vld [vmem:[#allocation5 + $0x3a0] sm:$0xff]
    %v159 = vld [vmem:[#allocation5 + $0x3a8] sm:$0xff]
    %v160 = vld [vmem:[#allocation5 + $0x3b0] sm:$0xff]
    %v161 = vld [vmem:[#allocation5 + $0x3b8] sm:$0xff]
    %v162 = vld [vmem:[#allocation5 + $0x3c0] sm:$0xff]
    %v163 = vld [vmem:[#allocation5 + $0x3c8] sm:$0xff]
    %v164 = vld [vmem:[#allocation5 + $0x3d0] sm:$0xff]
    %v165 = vld [vmem:[#allocation5 + $0x3d8] sm:$0xff]
    %v166 = vld [vmem:[#allocation5 + $0x3e0] sm:$0xff]
    %v167 = vld [vmem:[#allocation5 + $0x3e8] sm:$0xff]
    %v168 = vld [vmem:[#allocation5 + $0x3f0] sm:$0xff]
    %v169 = vld [vmem:[#allocation5 + $0x3f8] sm:$0xff]
    %v298 = vunpack.c.l.b16 %v42
    %v299 = vunpack.c.h.b16 %v42
    %v300 = vunpack.c.l.b16 %v43
    %v301 = vunpack.c.h.b16 %v43
    %v302 = vunpack.c.l.b16 %v44
    %v303 = vunpack.c.h.b16 %v44
    %v304 = vunpack.c.l.b16 %v45
    %v305 = vunpack.c.h.b16 %v45
    %v306 = vunpack.c.l.b16 %v46
    %v307 = vunpack.c.h.b16 %v46
    %v308 = vunpack.c.l.b16 %v47
    %v309 = vunpack.c.h.b16 %v47
    %v310 = vunpack.c.l.b16 %v48
    %v311 = vunpack.c.h.b16 %v48
    %v312 = vunpack.c.l.b16 %v49
    %v313 = vunpack.c.h.b16 %v49
    %v314 = vunpack.c.l.b16 %v50
    %v315 = vunpack.c.h.b16 %v50
    %v316 = vunpack.c.l.b16 %v51
    %v317 = vunpack.c.h.b16 %v51
    %v318 = vunpack.c.l.b16 %v52
    %v319 = vunpack.c.h.b16 %v52
    %v320 = vunpack.c.l.b16 %v53
    %v321 = vunpack.c.h.b16 %v53
    %v322 = vunpack.c.l.b16 %v54
    %v323 = vunpack.c.h.b16 %v54
    %v324 = vunpack.c.l.b16 %v55
    %v325 = vunpack.c.h.b16 %v55
    %v326 = vunpack.c.l.b16 %v56
    %v327 = vunpack.c.h.b16 %v56
    %v328 = vunpack.c.l.b16 %v57
    %v329 = vunpack.c.h.b16 %v57
    %v330 = vunpack.c.l.b16 %v58
    %v331 = vunpack.c.h.b16 %v58
    %v332 = vunpack.c.l.b16 %v59
    %v333 = vunpack.c.h.b16 %v59
    %v334 = vunpack.c.l.b16 %v60
    %v335 = vunpack.c.h.b16 %v60
    %v336 = vunpack.c.l.b16 %v61
    %v337 = vunpack.c.h.b16 %v61
    %v338 = vunpack.c.l.b16 %v62
    %v339 = vunpack.c.h.b16 %v62
    %v340 = vunpack.c.l.b16 %v63
    %v341 = vunpack.c.h.b16 %v63
    %v342 = vunpack.c.l.b16 %v64
    %v343 = vunpack.c.h.b16 %v64
    %v344 = vunpack.c.l.b16 %v65
    %v345 = vunpack.c.h.b16 %v65
    %v346 = vunpack.c.l.b16 %v66
    %v347 = vunpack.c.h.b16 %v66
    %v348 = vunpack.c.l.b16 %v67
    %v349 = vunpack.c.h.b16 %v67
    %v350 = vunpack.c.l.b16 %v68
    %v351 = vunpack.c.h.b16 %v68
    %v352 = vunpack.c.l.b16 %v69
    %v353 = vunpack.c.h.b16 %v69
    %v354 = vunpack.c.l.b16 %v70
    %v355 = vunpack.c.h.b16 %v70
    %v356 = vunpack.c.l.b16 %v71
    %v357 = vunpack.c.h.b16 %v71
    %v358 = vunpack.c.l.b16 %v72
    %v359 = vunpack.c.h.b16 %v72
    %v360 = vunpack.c.l.b16 %v73
    %v361 = vunpack.c.h.b16 %v73
    %v362 = vunpack.c.l.b16 %v74
    %v363 = vunpack.c.h.b16 %v74
    %v364 = vunpack.c.l.b16 %v75
    %v365 = vunpack.c.h.b16 %v75
    %v366 = vunpack.c.l.b16 %v76
    %v367 = vunpack.c.h.b16 %v76
    %v368 = vunpack.c.l.b16 %v77
    %v369 = vunpack.c.h.b16 %v77
    %v370 = vunpack.c.l.b16 %v78
    %v371 = vunpack.c.h.b16 %v78
    %v372 = vunpack.c.l.b16 %v79
    %v373 = vunpack.c.h.b16 %v79
    %v374 = vunpack.c.l.b16 %v80
    %v375 = vunpack.c.h.b16 %v80
    %v376 = vunpack.c.l.b16 %v81
    %v377 = vunpack.c.h.b16 %v81
    %v378 = vunpack.c.l.b16 %v82
    %v379 = vunpack.c.h.b16 %v82
    %v380 = vunpack.c.l.b16 %v83
    %v381 = vunpack.c.h.b16 %v83
    %v382 = vunpack.c.l.b16 %v84
    %v383 = vunpack.c.h.b16 %v84
    %v384 = vunpack.c.l.b16 %v85
    %v385 = vunpack.c.h.b16 %v85
    %v386 = vunpack.c.l.b16 %v86
    %v387 = vunpack.c.h.b16 %v86
    %v388 = vunpack.c.l.b16 %v87
    %v389 = vunpack.c.h.b16 %v87
    %v390 = vunpack.c.l.b16 %v88
    %v391 = vunpack.c.h.b16 %v88
    %v392 = vunpack.c.l.b16 %v89
    %v393 = vunpack.c.h.b16 %v89
    %v394 = vunpack.c.l.b16 %v90
    %v395 = vunpack.c.h.b16 %v90
    %v396 = vunpack.c.l.b16 %v91
    %v397 = vunpack.c.h.b16 %v91
    %v398 = vunpack.c.l.b16 %v92
    %v399 = vunpack.c.h.b16 %v92
    %v400 = vunpack.c.l.b16 %v93
    %v401 = vunpack.c.h.b16 %v93
    %v402 = vunpack.c.l.b16 %v94
    %v403 = vunpack.c.h.b16 %v94
    %v404 = vunpack.c.l.b16 %v95
    %v405 = vunpack.c.h.b16 %v95
    %v406 = vunpack.c.l.b16 %v96
    %v407 = vunpack.c.h.b16 %v96
    %v408 = vunpack.c.l.b16 %v97
    %v409 = vunpack.c.h.b16 %v97
    %v410 = vunpack.c.l.b16 %v98
    %v411 = vunpack.c.h.b16 %v98
    %v412 = vunpack.c.l.b16 %v99
    %v413 = vunpack.c.h.b16 %v99
    %v414 = vunpack.c.l.b16 %v100
    %v415 = vunpack.c.h.b16 %v100
    %v416 = vunpack.c.l.b16 %v101
    %v417 = vunpack.c.h.b16 %v101
    %v418 = vunpack.c.l.b16 %v102
    %v419 = vunpack.c.h.b16 %v102
    %v420 = vunpack.c.l.b16 %v103
    %v421 = vunpack.c.h.b16 %v103
    %v422 = vunpack.c.l.b16 %v104
    %v423 = vunpack.c.h.b16 %v104
    %v424 = vunpack.c.l.b16 %v105
    %v425 = vunpack.c.h.b16 %v105
    %v426 = vunpack.c.l.b16 %v106
    %v427 = vunpack.c.h.b16 %v106
    %v428 = vunpack.c.l.b16 %v107
    %v429 = vunpack.c.h.b16 %v107
    %v430 = vunpack.c.l.b16 %v108
    %v431 = vunpack.c.h.b16 %v108
    %v432 = vunpack.c.l.b16 %v109
    %v433 = vunpack.c.h.b16 %v109
    %v434 = vunpack.c.l.b16 %v110
    %v435 = vunpack.c.h.b16 %v110
    %v436 = vunpack.c.l.b16 %v111
    %v437 = vunpack.c.h.b16 %v111
    %v438 = vunpack.c.l.b16 %v112
    %v439 = vunpack.c.h.b16 %v112
    %v440 = vunpack.c.l.b16 %v113
    %v441 = vunpack.c.h.b16 %v113
    %v442 = vunpack.c.l.b16 %v114
    %v443 = vunpack.c.h.b16 %v114
    %v444 = vunpack.c.l.b16 %v115
    %v445 = vunpack.c.h.b16 %v115
    %v446 = vunpack.c.l.b16 %v116
    %v447 = vunpack.c.h.b16 %v116
    %v448 = vunpack.c.l.b16 %v117
    %v449 = vunpack.c.h.b16 %v117
    %v450 = vunpack.c.l.b16 %v118
    %v451 = vunpack.c.h.b16 %v118
    %v452 = vunpack.c.l.b16 %v119
    %v453 = vunpack.c.h.b16 %v119
    %v454 = vunpack.c.l.b16 %v120
    %v455 = vunpack.c.h.b16 %v120
    %v456 = vunpack.c.l.b16 %v121
    %v457 = vunpack.c.h.b16 %v121
    %v458 = vunpack.c.l.b16 %v122
    %v459 = vunpack.c.h.b16 %v122
    %v460 = vunpack.c.l.b16 %v123
    %v461 = vunpack.c.h.b16 %v123
    %v462 = vunpack.c.l.b16 %v124
    %v463 = vunpack.c.h.b16 %v124
    %v464 = vunpack.c.l.b16 %v125
    %v465 = vunpack.c.h.b16 %v125
    %v466 = vunpack.c.l.b16 %v126
    %v467 = vunpack.c.h.b16 %v126
    %v468 = vunpack.c.l.b16 %v127
    %v469 = vunpack.c.h.b16 %v127
    %v470 = vunpack.c.l.b16 %v128
    %v471 = vunpack.c.h.b16 %v128
    %v472 = vunpack.c.l.b16 %v129
    %v473 = vunpack.c.h.b16 %v129
    %v474 = vunpack.c.l.b16 %v130
    %v475 = vunpack.c.h.b16 %v130
    %v476 = vunpack.c.l.b16 %v131
    %v477 = vunpack.c.h.b16 %v131
    %v478 = vunpack.c.l.b16 %v132
    %v479 = vunpack.c.h.b16 %v132
    %v480 = vunpack.c.l.b16 %v133
    %v481 = vunpack.c.h.b16 %v133
    %v482 = vunpack.c.l.b16 %v134
    %v483 = vunpack.c.h.b16 %v134
    %v484 = vunpack.c.l.b16 %v135
    %v485 = vunpack.c.h.b16 %v135
    %v486 = vunpack.c.l.b16 %v136
    %v487 = vunpack.c.h.b16 %v136
    %v488 = vunpack.c.l.b16 %v137
    %v489 = vunpack.c.h.b16 %v137
    %v490 = vunpack.c.l.b16 %v138
    %v491 = vunpack.c.h.b16 %v138
    %v492 = vunpack.c.l.b16 %v139
    %v493 = vunpack.c.h.b16 %v139
    %v494 = vunpack.c.l.b16 %v140
    %v495 = vunpack.c.h.b16 %v140
    %v496 = vunpack.c.l.b16 %v141
    %v497 = vunpack.c.h.b16 %v141
    %v498 = vunpack.c.l.b16 %v142
    %v499 = vunpack.c.h.b16 %v142
    %v500 = vunpack.c.l.b16 %v143
    %v501 = vunpack.c.h.b16 %v143
    %v502 = vunpack.c.l.b16 %v144
    %v503 = vunpack.c.h.b16 %v144
    %v504 = vunpack.c.l.b16 %v145
    %v505 = vunpack.c.h.b16 %v145
    %v506 = vunpack.c.l.b16 %v146
    %v507 = vunpack.c.h.b16 %v146
    %v508 = vunpack.c.l.b16 %v147
    %v509 = vunpack.c.h.b16 %v147
    %v510 = vunpack.c.l.b16 %v148
    %v511 = vunpack.c.h.b16 %v148
    %v512 = vunpack.c.l.b16 %v149
    %v513 = vunpack.c.h.b16 %v149
    %v514 = vunpack.c.l.b16 %v150
    %v515 = vunpack.c.h.b16 %v150
    %v516 = vunpack.c.l.b16 %v151
    %v517 = vunpack.c.h.b16 %v151
    %v518 = vunpack.c.l.b16 %v152
    %v519 = vunpack.c.h.b16 %v152
    %v520 = vunpack.c.l.b16 %v153
    %v521 = vunpack.c.h.b16 %v153
    %v522 = vunpack.c.l.b16 %v154
    %v523 = vunpack.c.h.b16 %v154
    %v524 = vunpack.c.l.b16 %v155
    %v525 = vunpack.c.h.b16 %v155
    %v526 = vunpack.c.l.b16 %v156
    %v527 = vunpack.c.h.b16 %v156
    %v528 = vunpack.c.l.b16 %v157
    %v529 = vunpack.c.h.b16 %v157
    %v530 = vunpack.c.l.b16 %v158
    %v531 = vunpack.c.h.b16 %v158
    %v532 = vunpack.c.l.b16 %v159
    %v533 = vunpack.c.h.b16 %v159
    %v534 = vunpack.c.l.b16 %v160
    %v535 = vunpack.c.h.b16 %v160
    %v536 = vunpack.c.l.b16 %v161
    %v537 = vunpack.c.h.b16 %v161
    %v538 = vunpack.c.l.b16 %v162
    %v539 = vunpack.c.h.b16 %v162
    %v540 = vunpack.c.l.b16 %v163
    %v541 = vunpack.c.h.b16 %v163
    %v542 = vunpack.c.l.b16 %v164
    %v543 = vunpack.c.h.b16 %v164
    %v544 = vunpack.c.l.b16 %v165
    %v545 = vunpack.c.h.b16 %v165
    %v546 = vunpack.c.l.b16 %v166
    %v547 = vunpack.c.h.b16 %v166
    %v548 = vunpack.c.l.b16 %v167
    %v549 = vunpack.c.h.b16 %v167
    %v550 = vunpack.c.l.b16 %v168
    %v551 = vunpack.c.h.b16 %v168
    %v552 = vunpack.c.l.b16 %v169
    %v553 = vunpack.c.h.b16 %v169
    %v554 = vpack.c.b16 %v306, %v298
    %v555 = vpack.c.b16 %v307, %v299
    %v556 = vpack.c.b16 %v308, %v300
    %v557 = vpack.c.b16 %v309, %v301
    %v558 = vpack.c.b16 %v310, %v302
    %v559 = vpack.c.b16 %v311, %v303
    %v560 = vpack.c.b16 %v312, %v304
    %v561 = vpack.c.b16 %v313, %v305
    %v562 = vpack.c.b16 %v322, %v314
    %v563 = vpack.c.b16 %v323, %v315
    %v564 = vpack.c.b16 %v324, %v316
    %v565 = vpack.c.b16 %v325, %v317
    %v566 = vpack.c.b16 %v326, %v318
    %v567 = vpack.c.b16 %v327, %v319
    %v568 = vpack.c.b16 %v328, %v320
    %v569 = vpack.c.b16 %v329, %v321
    %v570 = vpack.c.b16 %v338, %v330
    %v571 = vpack.c.b16 %v339, %v331
    %v572 = vpack.c.b16 %v340, %v332
    %v573 = vpack.c.b16 %v341, %v333
    %v574 = vpack.c.b16 %v342, %v334
    %v575 = vpack.c.b16 %v343, %v335
    %v576 = vpack.c.b16 %v344, %v336
    %v577 = vpack.c.b16 %v345, %v337
    %v578 = vpack.c.b16 %v354, %v346
    %v579 = vpack.c.b16 %v355, %v347
    %v580 = vpack.c.b16 %v356, %v348
    %v581 = vpack.c.b16 %v357, %v349
    %v582 = vpack.c.b16 %v358, %v350
    %v583 = vpack.c.b16 %v359, %v351
    %v584 = vpack.c.b16 %v360, %v352
    %v585 = vpack.c.b16 %v361, %v353
    %v586 = vpack.c.b16 %v370, %v362
    %v587 = vpack.c.b16 %v371, %v363
    %v588 = vpack.c.b16 %v372, %v364
    %v589 = vpack.c.b16 %v373, %v365
    %v590 = vpack.c.b16 %v374, %v366
    %v591 = vpack.c.b16 %v375, %v367
    %v592 = vpack.c.b16 %v376, %v368
    %v593 = vpack.c.b16 %v377, %v369
    %v594 = vpack.c.b16 %v386, %v378
    %v595 = vpack.c.b16 %v387, %v379
    %v596 = vpack.c.b16 %v388, %v380
    %v597 = vpack.c.b16 %v389, %v381
    %v598 = vpack.c.b16 %v390, %v382
    %v599 = vpack.c.b16 %v391, %v383
    %v600 = vpack.c.b16 %v392, %v384
    %v601 = vpack.c.b16 %v393, %v385
    %v602 = vpack.c.b16 %v402, %v394
    %v603 = vpack.c.b16 %v403, %v395
    %v604 = vpack.c.b16 %v404, %v396
    %v605 = vpack.c.b16 %v405, %v397
    %v606 = vpack.c.b16 %v406, %v398
    %v607 = vpack.c.b16 %v407, %v399
    %v608 = vpack.c.b16 %v408, %v400
    %v609 = vpack.c.b16 %v409, %v401
    %v610 = vpack.c.b16 %v418, %v410
    %v611 = vpack.c.b16 %v419, %v411
    %v612 = vpack.c.b16 %v420, %v412
    %v613 = vpack.c.b16 %v421, %v413
    %v614 = vpack.c.b16 %v422, %v414
    %v615 = vpack.c.b16 %v423, %v415
    %v616 = vpack.c.b16 %v424, %v416
    %v617 = vpack.c.b16 %v425, %v417
    %v618 = vpack.c.b16 %v434, %v426
    %v619 = vpack.c.b16 %v435, %v427
    %v620 = vpack.c.b16 %v436, %v428
    %v621 = vpack.c.b16 %v437, %v429
    %v622 = vpack.c.b16 %v438, %v430
    %v623 = vpack.c.b16 %v439, %v431
    %v624 = vpack.c.b16 %v440, %v432
    %v625 = vpack.c.b16 %v441, %v433
    %v626 = vpack.c.b16 %v450, %v442
    %v627 = vpack.c.b16 %v451, %v443
    %v628 = vpack.c.b16 %v452, %v444
    %v629 = vpack.c.b16 %v453, %v445
    %v630 = vpack.c.b16 %v454, %v446
    %v631 = vpack.c.b16 %v455, %v447
    %v632 = vpack.c.b16 %v456, %v448
    %v633 = vpack.c.b16 %v457, %v449
    %v634 = vpack.c.b16 %v466, %v458
    %v635 = vpack.c.b16 %v467, %v459
    %v636 = vpack.c.b16 %v468, %v460
    %v637 = vpack.c.b16 %v469, %v461
    %v638 = vpack.c.b16 %v470, %v462
    %v639 = vpack.c.b16 %v471, %v463
    %v640 = vpack.c.b16 %v472, %v464
    %v641 = vpack.c.b16 %v473, %v465
    %v642 = vpack.c.b16 %v482, %v474
    %v643 = vpack.c.b16 %v483, %v475
    %v644 = vpack.c.b16 %v484, %v476
    %v645 = vpack.c.b16 %v485, %v477
    %v646 = vpack.c.b16 %v486, %v478
    %v647 = vpack.c.b16 %v487, %v479
    %v648 = vpack.c.b16 %v488, %v480
    %v649 = vpack.c.b16 %v489, %v481
    %v650 = vpack.c.b16 %v498, %v490
    %v651 = vpack.c.b16 %v499, %v491
    %v652 = vpack.c.b16 %v500, %v492
    %v653 = vpack.c.b16 %v501, %v493
    %v654 = vpack.c.b16 %v502, %v494
    %v655 = vpack.c.b16 %v503, %v495
    %v656 = vpack.c.b16 %v504, %v496
    %v657 = vpack.c.b16 %v505, %v497
    %v658 = vpack.c.b16 %v514, %v506
    %v659 = vpack.c.b16 %v515, %v507
    %v660 = vpack.c.b16 %v516, %v508
    %v661 = vpack.c.b16 %v517, %v509
    %v662 = vpack.c.b16 %v518, %v510
    %v663 = vpack.c.b16 %v519, %v511
    %v664 = vpack.c.b16 %v520, %v512
    %v665 = vpack.c.b16 %v521, %v513
    %v666 = vpack.c.b16 %v530, %v522
    %v667 = vpack.c.b16 %v531, %v523
    %v668 = vpack.c.b16 %v532, %v524
    %v669 = vpack.c.b16 %v533, %v525
    %v670 = vpack.c.b16 %v534, %v526
    %v671 = vpack.c.b16 %v535, %v527
    %v672 = vpack.c.b16 %v536, %v528
    %v673 = vpack.c.b16 %v537, %v529
    %v674 = vpack.c.b16 %v546, %v538
    %v675 = vpack.c.b16 %v547, %v539
    %v676 = vpack.c.b16 %v548, %v540
    %v677 = vpack.c.b16 %v549, %v541
    %v678 = vpack.c.b16 %v550, %v542
    %v679 = vpack.c.b16 %v551, %v543
    %v680 = vpack.c.b16 %v552, %v544
    %v681 = vpack.c.b16 %v553, %v545
    %810 = vmatprep.subr.bf16.mxu0 %v555
    %811 = vmatpush1.bf16.msra.mxu0 %v554
    %812 = vmatprep.subr.bf16.mxu0 %v563
    %813 = vmatpush1.bf16.msra.mxu0 %v562
    %814 = vmatprep.subr.bf16.mxu0 %v571
    %815 = vmatpush1.bf16.msra.mxu0 %v570
    %816 = vmatprep.subr.bf16.mxu0 %v579
    %817 = vmatpush1.bf16.msra.mxu0 %v578
    %818 = vmatprep.subr.bf16.mxu0 %v587
    %819 = vmatpush1.bf16.msra.mxu0 %v586
    %820 = vmatprep.subr.bf16.mxu0 %v595
    %821 = vmatpush1.bf16.msra.mxu0 %v594
    %822 = vmatprep.subr.bf16.mxu0 %v603
    %823 = vmatpush1.bf16.msra.mxu0 %v602
    %824 = vmatprep.subr.bf16.mxu0 %v611
    %825 = vmatpush1.bf16.msra.mxu0 %v610
    %826 = vmatprep.subr.bf16.mxu0 %v619
    %827 = vmatpush1.bf16.msra.mxu0 %v618
    %828 = vmatprep.subr.bf16.mxu0 %v627
    %829 = vmatpush1.bf16.msra.mxu0 %v626
    %830 = vmatprep.subr.bf16.mxu0 %v635
    %831 = vmatpush1.bf16.msra.mxu0 %v634
    %832 = vmatprep.subr.bf16.mxu0 %v643
    %833 = vmatpush1.bf16.msra.mxu0 %v642
    %834 = vmatprep.subr.bf16.mxu0 %v651
    %835 = vmatpush1.bf16.msra.mxu0 %v650
    %836 = vmatprep.subr.bf16.mxu0 %v659
    %837 = vmatpush1.bf16.msra.mxu0 %v658
    %838 = vmatprep.subr.bf16.mxu0 %v667
    %839 = vmatpush1.bf16.msra.mxu0 %v666
    %840 = vmatprep.subr.bf16.mxu0 %v675
    %841 = vmatpush1.bf16.msra.mxu0 %v674
    %842 = vmatprep.mubr.bf16.mxu0 %v41
    %843 = vmatmul.mubr.bf16.gmra.mrb[0].mxu0 %v40
    %v844 = vpop.f32.mrb[0].mxu0
    %v845 = vadd.f32 0.0, %v844
    %v846 = vpop.f32.mrb[0].mxu0
    %v847 = vadd.f32 0.0, %v846
    %v848 = vpop.f32.mrb[0].mxu0
    %v849 = vpop.f32.mrb[0].mxu0
    %850 = vdwg.mxu0
    %851 = vmatprep.subr.bf16.mxu0 %v557
    %852 = vmatpush1.bf16.msra.mxu0 %v556
    %853 = vmatprep.subr.bf16.mxu0 %v565
    %854 = vmatpush1.bf16.msra.mxu0 %v564
    %855 = vmatprep.subr.bf16.mxu0 %v573
    %856 = vmatpush1.bf16.msra.mxu0 %v572
    %857 = vmatprep.subr.bf16.mxu0 %v581
    %858 = vmatpush1.bf16.msra.mxu0 %v580
    %859 = vmatprep.subr.bf16.mxu0 %v589
    %860 = vmatpush1.bf16.msra.mxu0 %v588
    %861 = vmatprep.subr.bf16.mxu0 %v597
    %862 = vmatpush1.bf16.msra.mxu0 %v596
    %863 = vmatprep.subr.bf16.mxu0 %v605
    %864 = vmatpush1.bf16.msra.mxu0 %v604
    %865 = vmatprep.subr.bf16.mxu0 %v613
    %866 = vmatpush1.bf16.msra.mxu0 %v612
    %867 = vmatprep.subr.bf16.mxu0 %v621
    %868 = vmatpush1.bf16.msra.mxu0 %v620
    %869 = vmatprep.subr.bf16.mxu0 %v629
    %870 = vmatpush1.bf16.msra.mxu0 %v628
    %871 = vmatprep.subr.bf16.mxu0 %v637
    %872 = vmatpush1.bf16.msra.mxu0 %v636
    %873 = vmatprep.subr.bf16.mxu0 %v645
    %874 = vmatpush1.bf16.msra.mxu0 %v644
    %875 = vmatprep.subr.bf16.mxu0 %v653
    %876 = vmatpush1.bf16.msra.mxu0 %v652
    %877 = vmatprep.subr.bf16.mxu0 %v661
    %878 = vmatpush1.bf16.msra.mxu0 %v660
    %879 = vmatprep.subr.bf16.mxu0 %v669
    %880 = vmatpush1.bf16.msra.mxu0 %v668
    %881 = vmatprep.subr.bf16.mxu0 %v677
    %882 = vmatpush1.bf16.msra.mxu0 %v676
    %883 = vmatprep.mubr.bf16.mxu0 %v41
    %884 = vmatmul.mubr.bf16.gmra.mrb[0].mxu0 %v40
    %v885 = vpop.f32.mrb[0].mxu0
    %v886 = vadd.f32 0.0, %v885
    %v887 = vpop.f32.mrb[0].mxu0
    %v888 = vadd.f32 0.0, %v887
    %v889 = vpop.f32.mrb[0].mxu0
    %v890 = vpop.f32.mrb[0].mxu0
    %891 = vdwg.mxu0
    %892 = vmatprep.subr.bf16.mxu0 %v559
    %893 = vmatpush1.bf16.msra.mxu0 %v558
    %894 = vmatprep.subr.bf16.mxu0 %v567
    %895 = vmatpush1.bf16.msra.mxu0 %v566
    %896 = vmatprep.subr.bf16.mxu0 %v575
    %897 = vmatpush1.bf16.msra.mxu0 %v574
    %898 = vmatprep.subr.bf16.mxu0 %v583
    %899 = vmatpush1.bf16.msra.mxu0 %v582
    %900 = vmatprep.subr.bf16.mxu0 %v591
    %901 = vmatpush1.bf16.msra.mxu0 %v590
    %902 = vmatprep.subr.bf16.mxu0 %v599
    %903 = vmatpush1.bf16.msra.mxu0 %v598
    %904 = vmatprep.subr.bf16.mxu0 %v607
    %905 = vmatpush1.bf16.msra.mxu0 %v606
    %906 = vmatprep.subr.bf16.mxu0 %v615
    %907 = vmatpush1.bf16.msra.mxu0 %v614
    %908 = vmatprep.subr.bf16.mxu0 %v623
    %909 = vmatpush1.bf16.msra.mxu0 %v622
    %910 = vmatprep.subr.bf16.mxu0 %v631
    %911 = vmatpush1.bf16.msra.mxu0 %v630
    %912 = vmatprep.subr.bf16.mxu0 %v639
    %913 = vmatpush1.bf16.msra.mxu0 %v638
    %914 = vmatprep.subr.bf16.mxu0 %v647
    %915 = vmatpush1.bf16.msra.mxu0 %v646
    %916 = vmatprep.subr.bf16.mxu0 %v655
    %917 = vmatpush1.bf16.msra.mxu0 %v654
    %918 = vmatprep.subr.bf16.mxu0 %v663
    %919 = vmatpush1.bf16.msra.mxu0 %v662
    %920 = vmatprep.subr.bf16.mxu0 %v671
    %921 = vmatpush1.bf16.msra.mxu0 %v670
    %922 = vmatprep.subr.bf16.mxu0 %v679
    %923 = vmatpush1.bf16.msra.mxu0 %v678
    %924 = vmatprep.mubr.bf16.mxu0 %v41
    %925 = vmatmul.mubr.bf16.gmra.mrb[0].mxu0 %v40
    %v926 = vpop.f32.mrb[0].mxu0
    %v927 = vadd.f32 0.0, %v926
    %v928 = vpop.f32.mrb[0].mxu0
    %v929 = vadd.f32 0.0, %v928
    %v930 = vpop.f32.mrb[0].mxu0
    %v931 = vpop.f32.mrb[0].mxu0
    %932 = vdwg.mxu0
    %933 = vmatprep.subr.bf16.mxu0 %v561
    %934 = vmatpush1.bf16.msra.mxu0 %v560
    %935 = vmatprep.subr.bf16.mxu0 %v569
    %936 = vmatpush1.bf16.msra.mxu0 %v568
    %937 = vmatprep.subr.bf16.mxu0 %v577
    %938 = vmatpush1.bf16.msra.mxu0 %v576
    %939 = vmatprep.subr.bf16.mxu0 %v585
    %940 = vmatpush1.bf16.msra.mxu0 %v584
    %941 = vmatprep.subr.bf16.mxu0 %v593
    %942 = vmatpush1.bf16.msra.mxu0 %v592
    %943 = vmatprep.subr.bf16.mxu0 %v601
    %944 = vmatpush1.bf16.msra.mxu0 %v600
    %945 = vmatprep.subr.bf16.mxu0 %v609
    %946 = vmatpush1.bf16.msra.mxu0 %v608
    %947 = vmatprep.subr.bf16.mxu0 %v617
    %948 = vmatpush1.bf16.msra.mxu0 %v616
    %949 = vmatprep.subr.bf16.mxu0 %v625
    %950 = vmatpush1.bf16.msra.mxu0 %v624
    %951 = vmatprep.subr.bf16.mxu0 %v633
    %952 = vmatpush1.bf16.msra.mxu0 %v632
    %953 = vmatprep.subr.bf16.mxu0 %v641
    %954 = vmatpush1.bf16.msra.mxu0 %v640
    %955 = vmatprep.subr.bf16.mxu0 %v649
    %956 = vmatpush1.bf16.msra.mxu0 %v648
    %957 = vmatprep.subr.bf16.mxu0 %v657
    %958 = vmatpush1.bf16.msra.mxu0 %v656
    %959 = vmatprep.subr.bf16.mxu0 %v665
    %960 = vmatpush1.bf16.msra.mxu0 %v664
    %961 = vmatprep.subr.bf16.mxu0 %v673
    %962 = vmatpush1.bf16.msra.mxu0 %v672
    %963 = vmatprep.subr.bf16.mxu0 %v681
    %964 = vmatpush1.bf16.msra.mxu0 %v680
    %965 = vmatprep.mubr.bf16.mxu0 %v41
    %966 = vmatmul.mubr.bf16.gmra.mrb[0].mxu0 %v40
    %v967 = vpop.f32.mrb[0].mxu0
    %v968 = vadd.f32 0.0, %v967
    %v969 = vpop.f32.mrb[0].mxu0
    %v970 = vadd.f32 0.0, %v969
    %v971 = vpop.f32.mrb[0].mxu0
    %v972 = vpop.f32.mrb[0].mxu0
    %973 = vdwg.mxu0
    %974 = vst [vmem:[#allocation7] sm:$0xff] %v845
    %975 = vst [vmem:[#allocation7 + $0x8] sm:$0xff] %v847
    %976 = vst [vmem:[#allocation7 + $0x10] sm:$0xff] %v886
    %977 = vst [vmem:[#allocation7 + $0x18] sm:$0xff] %v888
    %978 = vst [vmem:[#allocation7 + $0x20] sm:$0xff] %v927
    %979 = vst [vmem:[#allocation7 + $0x28] sm:$0xff] %v929
    %980 = vst [vmem:[#allocation7 + $0x30] sm:$0xff] %v968
    %981 = vst [vmem:[#allocation7 + $0x38] sm:$0xff] %v970
    // Predicated region
    $region18: #{tpu_custom_call.1} parent=1 // pred_check
      _
    $region19: #{tpu_custom_call.1} parent=1 // pred_check_branch
      %983 = sbr.rel (0) target = $region21
    $region20: #{tpu_custom_call.1} parent=1 // pred_region
      %s985 = ssub.s32 1024, 1024
      %986 = vsyncadd [#allocation4], %s985
      %s988 = sshll.u32 [#allocation7], 4
      %s989 = int_to_ptr.vmem [resolvable:$true] %s988
      %991 = dma.vmem_to_hbm [thread:$0]  %s989, 1024, %s2, [#allocation4]
    $region21: #{tpu_custom_call.1} parent=1 // pred_fallthru
      _
    // Predicated region
    $region22: #{tpu_custom_call.1} parent=1 // pred_check
      _
    $region23: #{tpu_custom_call.1} parent=1 // pred_check_branch
      %993 = sbr.rel (0) target = $region25
    $region24: #{tpu_custom_call.1} parent=1 // pred_region
      %994 = dma.done [#allocation4], 1024
    $region25: #{tpu_custom_call.1} parent=1 // pred_fallthru
      _
    %995 = vsyncpa [#allocation3], 1
    %996 = vsyncpa [#allocation6], 1
    %997 = vsyncpa [#allocation4], 1

</llo_original>
